<compile_context>
chip_gen: v6e
topology: v6e:2x2x1
jax: 0.10.0
libtpu: 0.0.40
codegen_flags: <defaults>
</compile_context>

<pallas_src>
import math

import jax
import jax.numpy as jnp
from jax import lax
from jax.experimental import pallas as pl
from jax.experimental.pallas import tpu as pltpu

# OGB bond feature dims: [bond_type=5, bond_stereo=6, is_conjugated=2]
FULL_BOND_FEATURE_DIMS = [5, 6, 2]
VOCAB = FULL_BOND_FEATURE_DIMS[0]   # 5
VOCAB_PAD = 8                       # table rows padded to a sublane multiple


def _round_up(x, m):
    return ((x + m - 1) // m) * m


def _choose_group(emb_dim):
    """Edges packed per output row so the row width is a multiple of 128."""
    if emb_dim % 128 == 0:
        return 1
    g = 128 // math.gcd(emb_dim, 128)
    return g if g <= 8 else 1       # g in {2,4,8} iff emb_dim % 16 == 0


def _plan_tiles(n_rows, row_width, vmem_budget_bytes=8 << 20):
    """Return (rows per grid step, rows per in-kernel compute chunk)."""
    # ~16K f32 elements per chunk keeps the select chain's temporaries in vregs.
    ch = max(8, ((16 * 1024) // max(row_width, 1)) // 8 * 8)
    # Double-buffered I/O per row: output row + lane-padded (., 1) code row.
    per_row = 2 * (row_width * 4 + 512)
    tr = max(8, vmem_budget_bytes // per_row)
    tr_min = pl.cdiv(1 << 20, row_width * 4)    # >= ~1 MiB of output / step
    tr_split = pl.cdiv(n_rows, 16)              # aim for >= 16 grid steps
    tr = min(tr, max(tr_min, tr_split))
    tr = max(ch, (tr // ch) * ch)
    tr = min(tr, n_rows)                        # never exceed the array
    ch = min(ch, tr)
    return tr, ch


def _make_kernel(n_full, ch, rem, vocab):
    """Kernel over blocks: codes (TR,1) i32, shifts (1,W) i32, table (8,W) f32."""

    def kernel(code_ref, shift_ref, emb_ref, out_ref):
        def compute_rows(r0, rows):
            shift = shift_ref[...]                       # (1, W) int32
            emb = emb_ref[...]                           # (8, W) f32
            code = code_ref[pl.ds(r0, rows), :]          # (rows, 1) int32
            seg = jnp.bitwise_and(jnp.right_shift(code, shift), 15)
            acc = jnp.broadcast_to(emb[0:1, :], seg.shape)   # default: row 0
            for v in range(1, vocab):
                acc = jnp.where(seg == v, emb[v:v + 1, :], acc)
            out_ref[pl.ds(r0, rows), :] = acc.astype(out_ref.dtype)

        def body(i, carry):
            r0 = i * ch
            if ch % 8 == 0:
                r0 = pl.multiple_of(r0, 8)
            compute_rows(r0, ch)
            return carry

        lax.fori_loop(0, n_full, body, 0)
        if rem > 0:                                      # static tail chunk
            compute_rows(n_full * ch, rem)

    return kernel


@jax.jit
def bond1_encoder_forward(edge_attr, emb_table):
    """edge_attr: [E, F] int  |  emb_table: [VOCAB, D] f32  ->  [E, D] f32."""
    E = edge_attr.shape[0]
    D = emb_table.shape[1]

    G = _choose_group(D)
    W = G * D

    # Bond-type column; clamp so out-of-range values resolve to row 0 and can
    # never corrupt a neighbouring nibble of the packed code.
    idx = jnp.clip(edge_attr[:, 0].astype(jnp.int32), 0, 15)

    e_pad = _round_up(E, G)
    if e_pad != E:                      # only the tiny index vector is padded
        idx = jnp.pad(idx, (0, e_pad - E))
    n_rows = e_pad // G

    if G > 1:
        nib = jnp.left_shift(
            idx.reshape(n_rows, G),
            4 * jnp.arange(G, dtype=jnp.int32)[None, :],
        )
        code = jnp.sum(nib, axis=1, dtype=jnp.int32).reshape(n_rows, 1)
    else:
        code = idx.reshape(n_rows, 1)

    # Tiny resident constants: per-lane nibble shifts and the tiled table.
    shift = (4 * (jnp.arange(W, dtype=jnp.int32) // D)).reshape(1, W)
    emb_pad = jnp.zeros((VOCAB_PAD, D), emb_table.dtype).at[:VOCAB].set(emb_table)
    emb_tiled = jnp.tile(emb_pad, (1, G))                 # (8, W)

    tr, ch = _plan_tiles(n_rows, W)
    n_full, rem = tr // ch, tr % ch
    grid = (pl.cdiv(n_rows, tr),)

    out = pl.pallas_call(
        _make_kernel(n_full, ch, rem, VOCAB),
        out_shape=jax.ShapeDtypeStruct((n_rows, W), jnp.float32),
        grid_spec=pltpu.PrefetchScalarGridSpec(
            num_scalar_prefetch=0,
            grid=grid,
            in_specs=[
                pl.BlockSpec((tr, 1), lambda i: (i, 0)),          # packed codes
                pl.BlockSpec((1, W), lambda i: (0, 0)),           # nibble shifts
                pl.BlockSpec((VOCAB_PAD, W), lambda i: (0, 0)),   # tiled table
            ],
            out_specs=pl.BlockSpec((tr, W), lambda i: (i, 0)),
        ),
        compiler_params=pltpu.CompilerParams(
            dimension_semantics=("parallel",),
        ),
        cost_estimate=pl.CostEstimate(
            flops=10 * e_pad * D,
            transcendentals=0,
            bytes_accessed=e_pad * D * 4 + n_rows * 4 + (VOCAB_PAD + 1) * W * 4,
        ),
    )(code, shift, emb_tiled)

    out = out.reshape(e_pad, D)          # pure view of the packed rows
    return out[:E] if e_pad != E else out


def init_bond1_params(key, emb_dim):
    """Xavier-uniform init of Embedding(VOCAB, emb_dim), matching PyTorch."""
    bound = math.sqrt(6.0 / (VOCAB + emb_dim))
    return jax.random.uniform(
        key, (VOCAB, emb_dim), jnp.float32, minval=-bound, maxval=bound
    )


def _make_edge_attr(key, num_edges):
    cols = []
    ks = jax.random.split(key, len(FULL_BOND_FEATURE_DIMS))
    for k, dim in zip(ks, FULL_BOND_FEATURE_DIMS):
        cols.append(jax.random.randint(k, (num_edges, 1), 0, dim, jnp.int32))
    return jnp.concatenate(cols, axis=1)


if __name__ == "__main__":
    key = jax.random.PRNGKey(0)
    k_emb, k_attr = jax.random.split(key)

    # (emb_dim, num_edges):
    #   (32, 24): D % 16 == 0, E % G == 0  -> packed lane-dense path, no slice
    #   (32, 10): ragged E                 -> tiny index pad + output slice
    #   (256, 16): D % 128 == 0            -> G = 1, naturally lane-dense
    for emb_dim, num_edges in ((32, 24), (32, 10), (256, 16)):
        emb_table = init_bond1_params(jax.random.fold_in(k_emb, emb_dim), emb_dim)
        edge_attr = _make_edge_attr(
            jax.random.fold_in(k_attr, emb_dim * 1000 + num_edges), num_edges
        )

        out = jax.block_until_ready(bond1_encoder_forward(edge_attr, emb_table))

        ref = jnp.take(emb_table, edge_attr[:, 0], axis=0)
        assert out.shape == (num_edges, emb_dim)
        assert jnp.allclose(out, ref, atol=1e-6), "mismatch vs reference gather"

    print("KERNEL_OK")
</pallas_src>

<mosaic_0001>
module attributes {stable_mosaic.version = 11 : i64} {
  func.func @kernel(%arg0: i32, %arg1: memref<6x1xi32, #tpu.memory_space<vmem>>, %arg2: memref<1x128xi32, #tpu.memory_space<vmem>>, %arg3: memref<8x128xf32, #tpu.memory_space<vmem>>, %arg4: memref<6x128xf32, #tpu.memory_space<vmem>>) attributes {dimension_semantics = [#tpu.dimension_semantics<parallel>], iteration_bounds = array<i64: 1>, scalar_prefetch = 0 : i64, scratch_operands = 0 : i64, tpu.core_type = #tpu.core_type<tc>, window_params = [{transform_indices = @transform_0, window_bounds = array<i64: 6, 1>}, {pipeline_mode = #tpu.pipeline_mode<synchronous>, transform_indices = @transform_1, window_bounds = array<i64: 1, 128>}, {pipeline_mode = #tpu.pipeline_mode<synchronous>, transform_indices = @transform_2, window_bounds = array<i64: 8, 128>}, {transform_indices = @transform_3, window_bounds = array<i64: 6, 128>}]} {
    %c0_i32 = arith.constant 0 : i32
    %c6_i32 = arith.constant 6 : i32
    %0 = arith.muli %c0_i32, %c6_i32 : i32
    %c0 = arith.constant 0 : index
    %c0_0 = arith.constant 0 : index
    %1 = vector.load %arg2[%c0, %c0_0] : memref<1x128xi32, #tpu.memory_space<vmem>>, vector<1x128xi32>
    %c0_1 = arith.constant 0 : index
    %c0_2 = arith.constant 0 : index
    %2 = vector.load %arg3[%c0_1, %c0_2] : memref<8x128xf32, #tpu.memory_space<vmem>>, vector<8x128xf32>
    %3 = arith.index_cast %0 : i32 to index
    %c0_3 = arith.constant 0 : index
    %4 = vector.load %arg1[%3, %c0_3] : memref<6x1xi32, #tpu.memory_space<vmem>>, vector<6x1xi32>
    %5 = vector.broadcast %4 : vector<6x1xi32> to vector<6x128xi32>
    %6 = vector.broadcast %1 : vector<1x128xi32> to vector<6x128xi32>
    %7 = arith.shrsi %5, %6 : vector<6x128xi32>
    %c15_i32 = arith.constant 15 : i32
    %8 = vector.broadcast %c15_i32 : i32 to vector<6x128xi32>
    %9 = arith.andi %7, %8 : vector<6x128xi32>
    %10 = vector.extract_strided_slice %2 {offsets = [0, 0], sizes = [1, 128], strides = [1, 1]} : vector<8x128xf32> to vector<1x128xf32>
    %11 = vector.shape_cast %10 : vector<1x128xf32> to vector<1x128xf32>
    %12 = vector.broadcast %11 : vector<1x128xf32> to vector<6x128xf32>
    %c1_i32 = arith.constant 1 : i32
    %13 = vector.broadcast %c1_i32 : i32 to vector<6x128xi32>
    %14 = arith.cmpi eq, %9, %13 : vector<6x128xi32>
    %15 = vector.extract_strided_slice %2 {offsets = [1, 0], sizes = [1, 128], strides = [1, 1]} : vector<8x128xf32> to vector<1x128xf32>
    %16 = vector.shape_cast %15 : vector<1x128xf32> to vector<1x128xf32>
    %17 = vector.broadcast %16 : vector<1x128xf32> to vector<6x128xf32>
    %18 = arith.select %14, %17, %12 : vector<6x128xi1>, vector<6x128xf32>
    %c2_i32 = arith.constant 2 : i32
    %19 = vector.broadcast %c2_i32 : i32 to vector<6x128xi32>
    %20 = arith.cmpi eq, %9, %19 : vector<6x128xi32>
    %21 = vector.extract_strided_slice %2 {offsets = [2, 0], sizes = [1, 128], strides = [1, 1]} : vector<8x128xf32> to vector<1x128xf32>
    %22 = vector.shape_cast %21 : vector<1x128xf32> to vector<1x128xf32>
    %23 = vector.broadcast %22 : vector<1x128xf32> to vector<6x128xf32>
    %24 = arith.select %20, %23, %18 : vector<6x128xi1>, vector<6x128xf32>
    %c3_i32 = arith.constant 3 : i32
    %25 = vector.broadcast %c3_i32 : i32 to vector<6x128xi32>
    %26 = arith.cmpi eq, %9, %25 : vector<6x128xi32>
    %27 = vector.extract_strided_slice %2 {offsets = [3, 0], sizes = [1, 128], strides = [1, 1]} : vector<8x128xf32> to vector<1x128xf32>
    %28 = vector.shape_cast %27 : vector<1x128xf32> to vector<1x128xf32>
    %29 = vector.broadcast %28 : vector<1x128xf32> to vector<6x128xf32>
    %30 = arith.select %26, %29, %24 : vector<6x128xi1>, vector<6x128xf32>
    %c4_i32 = arith.constant 4 : i32
    %31 = vector.broadcast %c4_i32 : i32 to vector<6x128xi32>
    %32 = arith.cmpi eq, %9, %31 : vector<6x128xi32>
    %33 = vector.extract_strided_slice %2 {offsets = [4, 0], sizes = [1, 128], strides = [1, 1]} : vector<8x128xf32> to vector<1x128xf32>
    %34 = vector.shape_cast %33 : vector<1x128xf32> to vector<1x128xf32>
    %35 = vector.broadcast %34 : vector<1x128xf32> to vector<6x128xf32>
    %36 = arith.select %32, %35, %30 : vector<6x128xi1>, vector<6x128xf32>
    %37 = arith.index_cast %0 : i32 to index
    %c0_4 = arith.constant 0 : index
    %38 = vector.load %arg4[%37, %c0_4] : memref<6x128xf32, #tpu.memory_space<vmem>>, vector<6x128xf32>
    tpu.vector_store %arg4[%37, %c0_4], %36 {strides = array<i32>} : memref<6x128xf32, #tpu.memory_space<vmem>>, vector<6x128xf32>,
    %c1_i32_5 = arith.constant 1 : i32
    return
  }
  func.func @transform_0(%arg0: i32) -> (i32, i32) {
    %c0_i32 = arith.constant 0 : i32
    %c0_i32_0 = arith.constant 0 : i32
    return %arg0, %c0_i32 : i32, i32
  }
  func.func @transform_1(%arg0: i32) -> (i32, i32) {
    %c0_i32 = arith.constant 0 : i32
    %c0_i32_0 = arith.constant 0 : i32
    %c0_i32_1 = arith.constant 0 : i32
    return %c0_i32, %c0_i32_0 : i32, i32
  }
  func.func @transform_2(%arg0: i32) -> (i32, i32) {
    %c0_i32 = arith.constant 0 : i32
    %c0_i32_0 = arith.constant 0 : i32
    %c0_i32_1 = arith.constant 0 : i32
    return %c0_i32, %c0_i32_0 : i32, i32
  }
  func.func @transform_3(%arg0: i32) -> (i32, i32) {
    %c0_i32 = arith.constant 0 : i32
    %c0_i32_0 = arith.constant 0 : i32
    return %arg0, %c0_i32 : i32, i32
  }
}

</mosaic_0001>

<llo_original>
// kernel: tile.9
$region0: #{tile.9}
  %s0 = inlined_call_operand.vmem [shape: f32[8,4,32], index: 0, kind: input, shape index: {}]
  %s1 = inlined_call_operand.vmem [shape: f32[8,128], index: 1, kind: output, shape index: {}]
  $region1: #{tile.9} parent=0
    #allocation0 [shape = 'u8[32768]{0}', space=vmem, size = 0x8000, scoped, tag = 'scoped mem for input reshape']
    %s3 = sshll.u32 1, 4
    %s4 = ssub.s32 %s3, 1
    %s5 = smul.addr 4, 7
    %s6 = scalar_lea.vmem %s0, %s5
    %v7 = vld [vmem:[%s6] sm:%s4]
    %s8 = scalar_lea.vmem [#allocation0], 56
    %9 = vst [vmem:[%s8] sm:%s4] %v7
    %s10 = smul.addr 4, 6
    %s11 = scalar_lea.vmem %s0, %s10
    %v12 = vld [vmem:[%s11] sm:%s4]
    %s13 = scalar_lea.vmem [#allocation0], 48
    %14 = vst [vmem:[%s13] sm:%s4] %v12
    %s15 = smul.addr 4, 5
    %s16 = scalar_lea.vmem %s0, %s15
    %v17 = vld [vmem:[%s16] sm:%s4]
    %s18 = scalar_lea.vmem [#allocation0], 40
    %19 = vst [vmem:[%s18] sm:%s4] %v17
    %s20 = smul.addr 4, 4
    %s21 = scalar_lea.vmem %s0, %s20
    %v22 = vld [vmem:[%s21] sm:%s4]
    %s23 = scalar_lea.vmem [#allocation0], 32
    %24 = vst [vmem:[%s23] sm:%s4] %v22
    %s25 = smul.addr 4, 3
    %s26 = scalar_lea.vmem %s0, %s25
    %v27 = vld [vmem:[%s26] sm:%s4]
    %s28 = scalar_lea.vmem [#allocation0], 24
    %29 = vst [vmem:[%s28] sm:%s4] %v27
    %s30 = smul.addr 4, 2
    %s31 = scalar_lea.vmem %s0, %s30
    %v32 = vld [vmem:[%s31] sm:%s4]
    %s33 = scalar_lea.vmem [#allocation0], 16
    %34 = vst [vmem:[%s33] sm:%s4] %v32
    %s35 = scalar_lea.vmem %s0, 4
    %v36 = vld [vmem:[%s35] sm:%s4]
    %s37 = scalar_lea.vmem [#allocation0], 8
    %38 = vst [vmem:[%s37] sm:%s4] %v36
    %v39 = vld [vmem:[%s0] sm:%s4]
    %40 = vst [vmem:[#allocation0] sm:%s4] %v39
    %v41 = vld [vmem:[#allocation0] ss:$8 sm:$0xf]
    %v42 = vld [vmem:[#allocation0] ss:$8 sm:$0xf0]
    %vm43 = vcmask 1047556
    %v44 = vsel %vm43, %v42, %v41
    %vm45 = vcmask 261120
    %46 = vst.msk [vmem:[%s1] sm:$0xff] %vm45, %v44
    %s47 = scalar_lea.vmem [#allocation0], 3
    %v48 = vld [vmem:[%s47] ss:$8 sm:$0xf]
    %s49 = scalar_lea.vmem [#allocation0], 3
    %v50 = vld [vmem:[%s49] ss:$8 sm:$0xf0]
    %vm51 = vcmask 1047556
    %v52 = vsel %vm51, %v50, %v48
    %53 = vrot.lane.b32.xlu0 %v52, 96
    %v54 = vpop.permute.xlu0 %53
    %vm55 = vcmask 1048320
    %56 = vst.msk [vmem:[%s1] sm:$0xff] %vm55, %v54
    %s57 = scalar_lea.vmem [#allocation0], 2
    %v58 = vld [vmem:[%s57] ss:$8 sm:$0xf]
    %s59 = scalar_lea.vmem [#allocation0], 2
    %v60 = vld [vmem:[%s59] ss:$8 sm:$0xf0]
    %vm61 = vcmask 1047556
    %v62 = vsel %vm61, %v60, %v58
    %63 = vrot.lane.b32.xlu0 %v62, 64
    %v64 = vpop.permute.xlu0 %63
    %vm65 = vcmask 785920
    %66 = vst.msk [vmem:[%s1] sm:$0xff] %vm65, %v64
    %s67 = scalar_lea.vmem [#allocation0], 1
    %v68 = vld [vmem:[%s67] ss:$8 sm:$0xf]
    %s69 = scalar_lea.vmem [#allocation0], 1
    %v70 = vld [vmem:[%s69] ss:$8 sm:$0xf0]
    %vm71 = vcmask 1047556
    %v72 = vsel %vm71, %v70, %v68
    %73 = vrot.lane.b32.xlu0 %v72, 32
    %v74 = vpop.permute.xlu0 %73
    %vm75 = vcmask 523520
    %76 = vst.msk [vmem:[%s1] sm:$0xff] %vm75, %v74

// kernel: bond1_encoder_forward.1
$region0: #{bond1_encoder_forward.1}
  #allocation0 [shape = 'u32[]', space=smem, size = 0x4, offset = 0x4, fixed_abs, tag = 'smem constant byte address 0x4 - core index']
  #allocation1 [shape = 'u32[144,128]{1,0:T(1,128)}', space=vmem, size = 0x12000, scoped, tag = 'internal scratch']
  %s0 = inlined_call_operand.vmem [shape: s32[6,1], index: 0, kind: input, shape index: {}]
  %s1 = inlined_call_operand.vmem [shape: s32[1,128], index: 1, kind: input, shape index: {}]
  %s2 = inlined_call_operand.vmem [shape: f32[8,128], index: 2, kind: input, shape index: {}]
  %s3 = inlined_call_operand.vmem [shape: f32[6,128], index: 3, kind: output, shape index: {}]
  %s4 = sld [smem:[#allocation0]]
  $region22: #{bond1_encoder_forward.1} parent=0
    _
  %s6 = ssub.s32 1, %s4
  %s7 = scalar_select 0, %s6, %s4
  // Predicated region
  $region2: #{bond1_encoder_forward.1} parent=0 // pred_check
    _
  $region3: #{bond1_encoder_forward.1} parent=0 // pred_check_branch
    %9 = sbr.rel (0) target = $region5
  $region4: #{bond1_encoder_forward.1} parent=0 // pred_region
    _
  $region5: #{bond1_encoder_forward.1} parent=0 // pred_fallthru
    _
  // Predicated region
  $region6: #{bond1_encoder_forward.1} parent=0 // pred_check
    _
  $region7: #{bond1_encoder_forward.1} parent=0 // pred_check_branch
    %11 = sbr.rel (0) target = $region9
  $region8: #{bond1_encoder_forward.1} parent=0 // pred_region
    _
  $region9: #{bond1_encoder_forward.1} parent=0 // pred_fallthru
    _
  // Predicated region
  $region10: #{bond1_encoder_forward.1} parent=0 // pred_check
    _
  $region11: #{bond1_encoder_forward.1} parent=0 // pred_check_branch
    %13 = sbr.rel (0) target = $region13
  $region12: #{bond1_encoder_forward.1} parent=0 // pred_region
    _
  $region13: #{bond1_encoder_forward.1} parent=0 // pred_fallthru
    _
  %v14 = vld [vmem:[%s1] sm:$0x1]
  %v15 = vld [vmem:[%s2] sm:$0xff]
  %v16 = vld [vmem:[%s0] sm:$0x3f]
  %17 = vset.pattern.permute.xlu0 0
  %18 = vperm.xlu0 %17, %v16
  %v19 = vpop.permute.xlu0 %18
  %v20 = vlaneseq
  %v21 = vshrl.u32 %v20, 7
  %v22 = vsub.s32 0, %v21
  %v23 = vrot.slane %v14, %v22
  %v24 = vshra.s32 %v19, %v23
  %v25 = vand.u32 %v24, 15
  %v26 = vlaneseq
  %v27 = vshrl.u32 %v26, 7
  %v28 = vsub.s32 0, %v27
  %v29 = vrot.slane %v15, %v28
  %vm30 = vcmp.eq.s32.totalorder %v25, 1
  %v31 = vlaneseq
  %v32 = vshrl.u32 %v31, 7
  %v33 = vsub.s32 1, %v32
  %v34 = vrot.slane %v15, %v33
  %v35 = vsel %vm30, %v34, %v29
  %vm36 = vcmp.eq.s32.totalorder %v25, 2
  %v37 = vlaneseq
  %v38 = vshrl.u32 %v37, 7
  %v39 = vsub.s32 2, %v38
  %v40 = vrot.slane %v15, %v39
  %v41 = vsel %vm36, %v40, %v35
  %vm42 = vcmp.eq.s32.totalorder %v25, 3
  %v43 = vlaneseq
  %v44 = vshrl.u32 %v43, 7
  %v45 = vsub.s32 3, %v44
  %v46 = vrot.slane %v15, %v45
  %v47 = vsel %vm42, %v46, %v41
  %vm48 = vcmp.eq.s32.totalorder %v25, 4
  %v49 = vlaneseq
  %v50 = vshrl.u32 %v49, 7
  %v51 = vsub.s32 4, %v50
  %v52 = vrot.slane %v15, %v51
  %v53 = vsel %vm48, %v52, %v47
  %54 = vst [vmem:[%s3] sm:$0x3f] %v53
  // Predicated region
  $region14: #{bond1_encoder_forward.1} parent=0 // pred_check
    _
  $region15: #{bond1_encoder_forward.1} parent=0 // pred_check_branch
    %56 = sbr.rel (0) target = $region17
  $region16: #{bond1_encoder_forward.1} parent=0 // pred_region
    _
  $region17: #{bond1_encoder_forward.1} parent=0 // pred_fallthru
    _
  // Predicated region
  $region18: #{bond1_encoder_forward.1} parent=0 // pred_check
    _
  $region19: #{bond1_encoder_forward.1} parent=0 // pred_check_branch
    %58 = sbr.rel (0) target = $region21
  $region20: #{bond1_encoder_forward.1} parent=0 // pred_region
    _
  $region21: #{bond1_encoder_forward.1} parent=0 // pred_fallthru
    _

</llo_original>
